<compile_context>
chip_gen: v7x
topology: tpu7x:2x2x1
jax: 0.10.0
libtpu: 0.0.40
codegen_flags: <defaults>
</compile_context>

<pallas_src>
import jax
import jax.numpy as jnp
import numpy as np
from jax.experimental import pallas as pl
from jax.experimental.pallas import tpu as pltpu


def _from_rgb_kernel(x_ref, w_ref, b_ref, o_ref):
    # x_ref: (nb, C_in, tile_p)   w_ref: (C_out, C_in)
    # b_ref: (C_out, 1)           o_ref: (nb, C_out, tile_p)
    x = x_ref[...].astype(jnp.float32)          # (nb, C_in, tile_p)
    w = w_ref[...].astype(jnp.float32)          # (C_out, C_in)
    b = b_ref[...].astype(jnp.float32)          # (C_out, 1)

    c_in = x.shape[1]

    # 1x1 equalized conv == per-pixel channel contraction (weight pre-scaled).
    # K is tiny (3) -> do it on the VPU: C_in fmul + (C_in-1) fadd per output vreg,
    # trivially hidden under the DMA. Pixels stay lane-dense.
    y = None
    for c in range(c_in):
        term = w[None, :, c:c + 1] * x[:, c:c + 1, :]   # (nb, C_out, tile_p)
        y = term if y is None else y + term
    y = y + b[None, :, :]

    # LeakyReLU(0.2)
    y = jnp.where(y > 0, y, 0.2 * y)

    # PixelwiseNorm: x / sqrt(mean_c(x^2) + 1e-8). Channel axis is the sublane
    # axis (axis=1); rsqrt goes to the EUP (free slot) instead of sqrt + div.
    inv = jax.lax.rsqrt(jnp.mean(y * y, axis=1, keepdims=True) + 1e-8)  # (nb,1,tile_p)
    o_ref[...] = (y * inv).astype(o_ref.dtype)


def from_rgb_pallas(x_nchw, weight, bias, scale, *, tile_p=32768,
                    out_dtype=jnp.float32):
    """
    x_nchw : (N, 3, H, W)           (PyTorch NCHW layout, consumed directly)
    weight : (C_out, 3, 1, 1)       (PyTorch conv weight layout)
    bias   : (C_out,)
    scale  : python float, equalized-lr scale (sqrt(2)/sqrt(fan_in))
    tile_p : lane-tile (pixels per grid step). 32768 fits every generation's
             default scoped-VMEM limit (incl. v5e's 16 MiB); raise only with an
             explicit vmem_limit_bytes.
    returns: (N, C_out, H, W) in out_dtype (f32 by default; bf16 halves the
             dominant HBM write traffic if the next layer tolerates it).
    """
    N, C_in, H, W = x_nchw.shape
    C_out = weight.shape[0]
    HW = H * W

    # Contiguous reshape only (no transpose): NCHW -> (N, C_in, H*W).
    x = x_nchw.reshape(N, C_in, HW)

    # Lane tile: whole image if it fits (full-extent last dim needs no 128
    # alignment), else a multiple of 128; ragged last block handled by Pallas.
    if HW <= tile_p:
        tp = HW
    else:
        tp = max(128, (tile_p // 128) * 128)
    n_hw_blocks = pl.cdiv(HW, tp)

    # Small-image path: amortize fixed per-step overhead by blocking over N,
    # but keep >= 2 grid steps when possible so v7x's 2 TensorCores both work.
    if n_hw_blocks == 1 and N > 1:
        target_nb = max(1, tile_p // max(HW, 1))
        target_nb = min(target_nb, max(1, N // 2))
        nb = max(d for d in range(1, N + 1) if N % d == 0 and d <= target_nb)
    else:
        nb = 1
    n_n_blocks = N // nb

    # Pre-scale weight (equalized lr): (C_out, C_in); bias as a (C_out, 1) column.
    w_mat = (weight.reshape(C_out, C_in) * jnp.float32(scale)).astype(jnp.float32)
    b_mat = bias.reshape(C_out, 1).astype(jnp.float32)

    in_bytes = x.dtype.itemsize
    out_bytes = jnp.dtype(out_dtype).itemsize
    cost = pl.CostEstimate(
        flops=2 * N * HW * C_out * C_in + 4 * N * HW * C_out,
        transcendentals=N * HW,
        bytes_accessed=N * HW * (C_in * in_bytes + C_out * out_bytes),
    )

    grid = (n_n_blocks, n_hw_blocks)
    out = pl.pallas_call(
        _from_rgb_kernel,
        out_shape=jax.ShapeDtypeStruct((N, C_out, HW), out_dtype),
        grid_spec=pltpu.PrefetchScalarGridSpec(
            num_scalar_prefetch=0,
            grid=grid,
            in_specs=[
                pl.BlockSpec((nb, C_in, tp), lambda n, j: (n, 0, j)),
                pl.BlockSpec((C_out, C_in), lambda n, j: (0, 0)),
                pl.BlockSpec((C_out, 1), lambda n, j: (0, 0)),
            ],
            out_specs=pl.BlockSpec((nb, C_out, tp), lambda n, j: (n, 0, j)),
        ),
        compiler_params=pltpu.CompilerParams(
            dimension_semantics=("parallel", "parallel"),
        ),
        cost_estimate=cost,
    )(x, w_mat, b_mat)

    # Contiguous reshape only: (N, C_out, H*W) -> NCHW.
    return out.reshape(N, C_out, H, W)


def from_rgb_reference(x_nchw, weight, bias, scale):
    """Pure-JAX reference mirroring the PyTorch forward (for self-check)."""
    C_out, C_in = weight.shape[0], weight.shape[1]
    w_mat = weight.reshape(C_out, C_in) * jnp.float32(scale)
    y = jnp.einsum("nchw,oc->nohw", x_nchw, w_mat) + bias[None, :, None, None]
    y = jnp.where(y > 0, y, 0.2 * y)
    denom = jnp.sqrt(jnp.mean(y * y, axis=1, keepdims=True) + 1e-8)
    return y / denom


if __name__ == "__main__":
    key = jax.random.PRNGKey(0)
    k_x, k_w, k_x2, k_x3 = jax.random.split(key, 4)

    # Module config: from_rgb(outchannels=32), use_eql=True.
    C_in, C_out = 3, 32
    # _equalized_conv2d(3, C_out, (1,1), bias=True):
    #   weight ~ N(0,1) of shape (C_out, 3, 1, 1), bias = 0, scale = sqrt(2)/sqrt(3)
    weight = jax.random.normal(k_w, (C_out, C_in, 1, 1), dtype=jnp.float32)
    bias = jnp.zeros((C_out,), dtype=jnp.float32)
    scale = float(np.sqrt(2.0) / np.sqrt(C_in * 1 * 1))

    # 1) Primary small case, f32 output (tight tolerance).
    x = jax.random.normal(k_x, (2, C_in, 16, 16), dtype=jnp.float32)
    out = jax.block_until_ready(from_rgb_pallas(x, weight, bias, scale))
    ref = jax.block_until_ready(from_rgb_reference(x, weight, bias, scale))
    np.testing.assert_allclose(np.asarray(out), np.asarray(ref), rtol=1e-5, atol=1e-5)

    # 2) Same inputs, bf16 output (f32 math inside the kernel, loose tolerance).
    out_bf16 = jax.block_until_ready(
        from_rgb_pallas(x, weight, bias, scale, out_dtype=jnp.bfloat16))
    np.testing.assert_allclose(np.asarray(out_bf16).astype(np.float32),
                               np.asarray(ref), rtol=2e-2, atol=2e-2)

    # 3) Ragged lane-block path (HW=324 not a multiple of the 128 tile): no pad,
    #    no output slice; masked OOB store keeps results correct.
    x_rag = jax.random.normal(k_x2, (2, C_in, 18, 18), dtype=jnp.float32)
    out_rag = jax.block_until_ready(
        from_rgb_pallas(x_rag, weight, bias, scale, tile_p=128))
    ref_rag = jax.block_until_ready(from_rgb_reference(x_rag, weight, bias, scale))
    np.testing.assert_allclose(np.asarray(out_rag), np.asarray(ref_rag),
                               rtol=1e-5, atol=1e-5)

    # 4) Batch-blocked small-image path (several batch elements per grid step).
    x_nb = jax.random.normal(k_x3, (4, C_in, 16, 16), dtype=jnp.float32)
    out_nb = jax.block_until_ready(from_rgb_pallas(x_nb, weight, bias, scale))
    ref_nb = jax.block_until_ready(from_rgb_reference(x_nb, weight, bias, scale))
    np.testing.assert_allclose(np.asarray(out_nb), np.asarray(ref_nb),
                               rtol=1e-5, atol=1e-5)

    print("KERNEL_OK")
</pallas_src>

<mosaic_0001>
module attributes {stable_mosaic.version = 11 : i64} {
  func.func @_from_rgb_kernel(%arg0: i32, %arg1: i32, %arg2: memref<1x3x256xf32, #tpu.memory_space<vmem>>, %arg3: memref<32x3xf32, #tpu.memory_space<vmem>>, %arg4: memref<32x1xf32, #tpu.memory_space<vmem>>, %arg5: memref<1x32x256xf32, #tpu.memory_space<vmem>>) attributes {dimension_semantics = [#tpu.dimension_semantics<parallel>, #tpu.dimension_semantics<parallel>], iteration_bounds = array<i64: 2, 1>, scalar_prefetch = 0 : i64, scratch_operands = 0 : i64, tpu.core_type = #tpu.core_type<tc>, window_params = [{transform_indices = @transform_0, window_bounds = array<i64: 1, 3, 256>}, {pipeline_mode = #tpu.pipeline_mode<synchronous>, transform_indices = @transform_1, window_bounds = array<i64: 32, 3>}, {pipeline_mode = #tpu.pipeline_mode<synchronous>, transform_indices = @transform_2, window_bounds = array<i64: 32, 1>}, {transform_indices = @transform_3, window_bounds = array<i64: 1, 32, 256>}]} {
    %c0 = arith.constant 0 : index
    %c0_0 = arith.constant 0 : index
    %c0_1 = arith.constant 0 : index
    %0 = vector.load %arg2[%c0, %c0_0, %c0_1] : memref<1x3x256xf32, #tpu.memory_space<vmem>>, vector<1x3x256xf32>
    %c0_2 = arith.constant 0 : index
    %c0_3 = arith.constant 0 : index
    %1 = vector.load %arg3[%c0_2, %c0_3] : memref<32x3xf32, #tpu.memory_space<vmem>>, vector<32x3xf32>
    %c0_4 = arith.constant 0 : index
    %c0_5 = arith.constant 0 : index
    %2 = vector.load %arg4[%c0_4, %c0_5] : memref<32x1xf32, #tpu.memory_space<vmem>>, vector<32x1xf32>
    %3 = vector.extract_strided_slice %1 {offsets = [0, 0], sizes = [32, 1], strides = [1, 1]} : vector<32x3xf32> to vector<32x1xf32>
    %4 = vector.shape_cast %3 : vector<32x1xf32> to vector<1x32x1xf32>
    %5 = vector.extract_strided_slice %0 {offsets = [0, 0, 0], sizes = [1, 1, 256], strides = [1, 1, 1]} : vector<1x3x256xf32> to vector<1x1x256xf32>
    %6 = vector.broadcast %4 : vector<1x32x1xf32> to vector<1x32x256xf32>
    %7 = vector.broadcast %5 : vector<1x1x256xf32> to vector<1x32x256xf32>
    %8 = arith.mulf %6, %7 : vector<1x32x256xf32>
    %9 = vector.extract_strided_slice %1 {offsets = [0, 1], sizes = [32, 1], strides = [1, 1]} : vector<32x3xf32> to vector<32x1xf32>
    %10 = vector.shape_cast %9 : vector<32x1xf32> to vector<1x32x1xf32>
    %11 = vector.extract_strided_slice %0 {offsets = [0, 1, 0], sizes = [1, 1, 256], strides = [1, 1, 1]} : vector<1x3x256xf32> to vector<1x1x256xf32>
    %12 = vector.broadcast %10 : vector<1x32x1xf32> to vector<1x32x256xf32>
    %13 = vector.broadcast %11 : vector<1x1x256xf32> to vector<1x32x256xf32>
    %14 = arith.mulf %12, %13 : vector<1x32x256xf32>
    %15 = arith.addf %8, %14 : vector<1x32x256xf32>
    %16 = vector.extract_strided_slice %1 {offsets = [0, 2], sizes = [32, 1], strides = [1, 1]} : vector<32x3xf32> to vector<32x1xf32>
    %17 = vector.shape_cast %16 : vector<32x1xf32> to vector<1x32x1xf32>
    %18 = vector.extract_strided_slice %0 {offsets = [0, 2, 0], sizes = [1, 1, 256], strides = [1, 1, 1]} : vector<1x3x256xf32> to vector<1x1x256xf32>
    %19 = vector.broadcast %17 : vector<1x32x1xf32> to vector<1x32x256xf32>
    %20 = vector.broadcast %18 : vector<1x1x256xf32> to vector<1x32x256xf32>
    %21 = arith.mulf %19, %20 : vector<1x32x256xf32>
    %22 = arith.addf %15, %21 : vector<1x32x256xf32>
    %23 = vector.shape_cast %2 : vector<32x1xf32> to vector<1x32x1xf32>
    %24 = vector.broadcast %23 : vector<1x32x1xf32> to vector<1x32x256xf32>
    %25 = arith.addf %22, %24 : vector<1x32x256xf32>
    %cst = arith.constant 0.000000e+00 : f32
    %26 = vector.broadcast %cst : f32 to vector<1x32x256xf32>
    %27 = arith.cmpf ogt, %25, %26 : vector<1x32x256xf32>
    %cst_6 = arith.constant 2.000000e-01 : f32
    %28 = vector.broadcast %cst_6 : f32 to vector<1x32x256xf32>
    %29 = arith.mulf %28, %25 : vector<1x32x256xf32>
    %30 = arith.select %27, %25, %29 : vector<1x32x256xi1>, vector<1x32x256xf32>
    %31 = arith.mulf %30, %30 : vector<1x32x256xf32>
    %cst_7 = arith.constant dense<0.000000e+00> : vector<1x256xf32>
    %32 = vector.multi_reduction <add>, %31, %cst_7 [1] : vector<1x32x256xf32> to vector<1x256xf32>
    %33 = vector.shape_cast %32 : vector<1x256xf32> to vector<1x1x256xf32>
    %cst_8 = arith.constant 3.200000e+01 : f32
    %34 = vector.broadcast %cst_8 : f32 to vector<1x1x256xf32>
    %35 = arith.divf %33, %34 : vector<1x1x256xf32>
    %cst_9 = arith.constant 9.99999993E-9 : f32
    %36 = vector.broadcast %cst_9 : f32 to vector<1x1x256xf32>
    %37 = arith.addf %35, %36 : vector<1x1x256xf32>
    %38 = math.rsqrt %37 : vector<1x1x256xf32>
    %39 = vector.broadcast %38 : vector<1x1x256xf32> to vector<1x32x256xf32>
    %40 = arith.mulf %30, %39 : vector<1x32x256xf32>
    %c0_10 = arith.constant 0 : index
    %c0_11 = arith.constant 0 : index
    %c0_12 = arith.constant 0 : index
    %41 = vector.load %arg5[%c0_10, %c0_11, %c0_12] : memref<1x32x256xf32, #tpu.memory_space<vmem>>, vector<1x32x256xf32>
    tpu.vector_store %arg5[%c0_10, %c0_11, %c0_12], %40 {strides = array<i32>} : memref<1x32x256xf32, #tpu.memory_space<vmem>>, vector<1x32x256xf32>,
    return
  }
  func.func @transform_0(%arg0: i32, %arg1: i32) -> (i32, i32, i32) {
    %c0_i32 = arith.constant 0 : i32
    %c0_i32_0 = arith.constant 0 : i32
    return %arg0, %c0_i32, %arg1 : i32, i32, i32
  }
  func.func @transform_1(%arg0: i32, %arg1: i32) -> (i32, i32) {
    %c0_i32 = arith.constant 0 : i32
    %c0_i32_0 = arith.constant 0 : i32
    %c0_i32_1 = arith.constant 0 : i32
    return %c0_i32, %c0_i32_0 : i32, i32
  }
  func.func @transform_2(%arg0: i32, %arg1: i32) -> (i32, i32) {
    %c0_i32 = arith.constant 0 : i32
    %c0_i32_0 = arith.constant 0 : i32
    %c0_i32_1 = arith.constant 0 : i32
    return %c0_i32, %c0_i32_0 : i32, i32
  }
  func.func @transform_3(%arg0: i32, %arg1: i32) -> (i32, i32, i32) {
    %c0_i32 = arith.constant 0 : i32
    %c0_i32_0 = arith.constant 0 : i32
    return %arg0, %c0_i32, %arg1 : i32, i32, i32
  }
}

</mosaic_0001>

<llo_original>
// kernel: tpu_custom_call.1
$region0: #{tpu_custom_call.1}
  #allocation0 [shape = 'u32[]', space=smem, size = 0x4, offset = 0x4, fixed_abs, tag = 'smem constant byte address 0x4 - core index']
  #allocation1 [shape = 'u32[144,128]{1,0:T(1,128)}', space=vmem, size = 0x12000, scoped, tag = 'internal scratch']
  %s0 = inlined_call_operand.vmem [shape: f32[2,3,256], index: 0, kind: input, shape index: {}]
  %s1 = inlined_call_operand.vmem [shape: f32[32,3], index: 1, kind: input, shape index: {}]
  %s2 = inlined_call_operand.vmem [shape: f32[32,1], index: 2, kind: input, shape index: {}]
  %s3 = inlined_call_operand.hbm [shape: f32[2,32,256], index: 3, kind: output, shape index: {}]
  %s4 = sld [smem:[#allocation0]]
  $region45: #{tpu_custom_call.1} parent=0
    _
  %s6 = ssub.s32 1, %s4
  %s7 = scalar_select 0, %s6, %s4
  $region1: #{tpu_custom_call.1} parent=0
    #allocation2 [shape = 'u8[65536]{0}', space=vmem, size = 0x10000, scoped, tag = 'output window, operand 0']
    #allocation3 [shape = 's32[2]{0}', space=sflag, size = 0x8, scoped, tag = 'scoped memory for tpu_custom_call.1']
    %8 = vsyncpa [#allocation3], 0
    %s9 = scalar_lea.sflag [#allocation3], 1
    %10 = vsyncpa %s9, 0
    loop: start=0, step=1, limit=4
    $region2: #{tpu_custom_call.1} parent=1 // loop_pre_header
      _
    $region3: #{tpu_custom_call.1} parent=1 // loop_header
      %s12 = sphi 0, %s16
      %p13 = scmp.ge.s32.totalorder %s12, 4
      %s19 = sphi 0, %s31
      %s20 = sphi 0, %s27
      %s21 = sphi 0, %s19
      %s22 = sphi 0, %s20
      %s23 = sphi 0, %s21
      %s24 = sphi 0, %s22
      %s36 = sphi 0, %s38
      %s39 = sphi 0, %s36
      %s40 = sphi 0, %s39
      %s56 = sphi 0, %s40
      %s60 = sphi 0, %s60
      %s62 = sphi 0, %s60
      %s63 = sphi 0, %s62
      %s77 = sphi 0, %s63
      %s81 = sphi 0, %s81
      %s83 = sphi 0, %s81
      %s84 = sphi 0, %s83
      %s98 = sphi 0, %s84
      %s106 = sphi 0, %s108
      %s109 = sphi 0, %s106
      %s110 = sphi 0, %s109
      %s126 = sphi 0, %s110
    $region4: #{tpu_custom_call.1} parent=1 // loop_header_branch
      %15 = sbr.rel (%p13) target = $region8
    $region5: #{tpu_custom_call.1} parent=1 // loop_body
      %s17 = ssub.s32 %s12, 1
      %s18 = ssub.s32 %s12, 2
      %s25 = sadd.s32 1, %s20
      %p26 = scmp.ge.s32.totalorder %s25, 1
      %s27 = scalar_select %p26, 0, %s25
      %s28 = sadd.s32 1, %s19
      %s29 = scalar_select %p26, %s28, %s19
      %p30 = scmp.ge.s32.totalorder %s29, 2
      %s31 = scalar_select %p30, 0, %s29
      %s32 = ssub.s32 %s19, %s31
      %s33 = ssub.s32 %s20, %s27
      %s34 = sor.u32 %s32, %s33
      %p35 = scmp.eq.s32.totalorder %s34, 0
      %s37 = sadd.s32 %s36, 1
      %s38 = scalar_select %p35, %s36, %s37
      %p41 = pneg %p35
      %p42 = scmp.eq.s32.totalorder %s12, 1
      %p43 = por %p41, %p42
      %p44 = scmp.ne.s32.totalorder %s36, %s39
      %p45 = scmp.eq.s32.totalorder %s12, 0
      %p46 = por %p44, %p45
      %p47 = scmp.ne.s32.totalorder %s36, %s39
      %p48 = scmp.eq.s32.totalorder %s17, 1
      %p49 = por %p47, %p48
      %p50 = scmp.ne.s32.totalorder %s39, %s40
      %p51 = scmp.eq.s32.totalorder %s17, 0
      %p52 = por %p50, %p51
      %p53 = scmp.ne.s32.totalorder %s39, %s40
      %p54 = scmp.eq.s32.totalorder %s18, 1
      %p55 = por %p53, %p54
      %p57 = scmp.ne.s32.totalorder %s40, %s56
      %p58 = scmp.eq.s32.totalorder %s18, 0
      %p59 = por %p57, %p58
      %s61 = sadd.s32 %s60, 1
      %p64 = scmp.eq.s32.totalorder %s12, 1
      %p65 = scmp.ne.s32.totalorder %s60, %s62
      %p66 = scmp.eq.s32.totalorder %s12, 0
      %p67 = por %p65, %p66
      %p68 = scmp.ne.s32.totalorder %s60, %s62
      %p69 = scmp.eq.s32.totalorder %s17, 1
      %p70 = por %p68, %p69
      %p71 = scmp.ne.s32.totalorder %s62, %s63
      %p72 = scmp.eq.s32.totalorder %s17, 0
      %p73 = por %p71, %p72
      %p74 = scmp.ne.s32.totalorder %s62, %s63
      %p75 = scmp.eq.s32.totalorder %s18, 1
      %p76 = por %p74, %p75
      %p78 = scmp.ne.s32.totalorder %s63, %s77
      %p79 = scmp.eq.s32.totalorder %s18, 0
      %p80 = por %p78, %p79
      %s82 = sadd.s32 %s81, 1
      %p85 = scmp.eq.s32.totalorder %s12, 1
      %p86 = scmp.ne.s32.totalorder %s81, %s83
      %p87 = scmp.eq.s32.totalorder %s12, 0
      %p88 = por %p86, %p87
      %p89 = scmp.ne.s32.totalorder %s81, %s83
      %p90 = scmp.eq.s32.totalorder %s17, 1
      %p91 = por %p89, %p90
      %p92 = scmp.ne.s32.totalorder %s83, %s84
      %p93 = scmp.eq.s32.totalorder %s17, 0
      %p94 = por %p92, %p93
      %p95 = scmp.ne.s32.totalorder %s83, %s84
      %p96 = scmp.eq.s32.totalorder %s18, 1
      %p97 = por %p95, %p96
      %p99 = scmp.ne.s32.totalorder %s84, %s98
      %p100 = scmp.eq.s32.totalorder %s18, 0
      %p101 = por %p99, %p100
      %s102 = ssub.s32 %s19, %s31
      %s103 = ssub.s32 %s20, %s27
      %s104 = sor.u32 %s102, %s103
      %p105 = scmp.eq.s32.totalorder %s104, 0
      %s107 = sadd.s32 %s106, 1
      %s108 = scalar_select %p105, %s106, %s107
      %p111 = pneg %p105
      %p112 = scmp.eq.s32.totalorder %s12, 1
      %p113 = por %p111, %p112
      %p114 = scmp.ne.s32.totalorder %s106, %s109
      %p115 = scmp.eq.s32.totalorder %s12, 0
      %p116 = por %p114, %p115
      %p117 = scmp.ne.s32.totalorder %s106, %s109
      %p118 = scmp.eq.s32.totalorder %s17, 1
      %p119 = por %p117, %p118
      %p120 = scmp.ne.s32.totalorder %s109, %s110
      %p121 = scmp.eq.s32.totalorder %s17, 0
      %p122 = por %p120, %p121
      %p123 = scmp.ne.s32.totalorder %s109, %s110
      %p124 = scmp.eq.s32.totalorder %s18, 1
      %p125 = por %p123, %p124
      %p127 = scmp.ne.s32.totalorder %s110, %s126
      %p128 = scmp.eq.s32.totalorder %s18, 0
      %p129 = por %p127, %p128
      %p130 = scmp.le.s32.totalorder 1, %s12
      %p131 = scmp.lt.s32.totalorder %s12, 3
      %p132 = pnand %p130, %p131
      %p133 = pneg %p132
      // Predicated region
      $region9: #{tpu_custom_call.1} parent=5 // pred_check
        _
      $region10: #{tpu_custom_call.1} parent=5 // pred_check_branch
        %135 = sbr.rel (%p132) target = $region12
      $region11: #{tpu_custom_call.1} parent=5 // pred_region
        %s136 = ssub.s32 %s12, 1
        // Predicated region
        $region13: #{tpu_custom_call.1} parent=11 // pred_check
          %p137 = pneg %p73
        $region14: #{tpu_custom_call.1} parent=11 // pred_check_branch
          %139 = sbr.rel (%p137) target = $region16
        $region15: #{tpu_custom_call.1} parent=11 // pred_region
          _
        $region16: #{tpu_custom_call.1} parent=11 // pred_fallthru
          _
        // Predicated region
        $region17: #{tpu_custom_call.1} parent=11 // pred_check
          %p140 = pneg %p94
        $region18: #{tpu_custom_call.1} parent=11 // pred_check_branch
          %142 = sbr.rel (%p140) target = $region20
        $region19: #{tpu_custom_call.1} parent=11 // pred_region
          _
        $region20: #{tpu_custom_call.1} parent=11 // pred_fallthru
          _
      $region12: #{tpu_custom_call.1} parent=5 // pred_fallthru
        _
      %p143 = scmp.lt.s32.totalorder %s12, 2
      // Predicated region
      $region21: #{tpu_custom_call.1} parent=5 // pred_check
        %p144 = pneg %p143
      $region22: #{tpu_custom_call.1} parent=5 // pred_check_branch
        %146 = sbr.rel (%p144) target = $region24
      $region23: #{tpu_custom_call.1} parent=5 // pred_region
        // Predicated region
        $region25: #{tpu_custom_call.1} parent=23 // pred_check
          %p147 = pneg %p46
        $region26: #{tpu_custom_call.1} parent=23 // pred_check_branch
          %149 = sbr.rel (%p147) target = $region28
        $region27: #{tpu_custom_call.1} parent=23 // pred_region
          %s150 = smul.u32 2, %s20
          %p151 = scmp.lt.s32.totalorder %s19, 1
          %s152 = scalar_select %p151, %s19, 1
          %p153 = scmp.lt.s32.totalorder %s150, 1
          %s154 = scalar_select %p153, %s150, 1
          %s155 = smul.addr %s152, 2
          %s156 = sadd.s32 %s154, %s155
          %s157 = smul.addr %s156, 4
          %s158 = scalar_lea.vmem %s0, %s157
          %s159 = smul.u32 2, %s20
        $region28: #{tpu_custom_call.1} parent=23 // pred_fallthru
          _
      $region24: #{tpu_custom_call.1} parent=5 // pred_fallthru
        _
      %p160 = scmp.le.s32.totalorder 1, %s12
      %p161 = scmp.lt.s32.totalorder %s12, 3
      %p162 = pnand %p160, %p161
      %p163 = pneg %p162
      // Predicated region
      $region29: #{tpu_custom_call.1} parent=5 // pred_check
        _
      $region30: #{tpu_custom_call.1} parent=5 // pred_check_branch
        %165 = sbr.rel (%p162) target = $region32
      $region31: #{tpu_custom_call.1} parent=5 // pred_region
        %s166 = ssub.s32 %s12, 1
        %s167 = smul.u32 2, %s22
        %p168 = scmp.lt.s32.totalorder %s21, 1
        %s169 = scalar_select %p168, %s21, 1
        %p170 = scmp.lt.s32.totalorder %s167, 1
        %s171 = scalar_select %p170, %s167, 1
        %s172 = smul.addr %s169, 2
        %s173 = sadd.s32 %s171, %s172
        %s174 = smul.addr %s173, 4
        %s175 = scalar_lea.vmem %s0, %s174
        %p176 = pneg %p52
        %p177 = pneg %p49
        %p178 = pneg %p73
        %p179 = pneg %p70
        %p180 = pneg %p94
        %p181 = pneg %p91
        %p182 = pneg %p122
        %p183 = pneg %p119
        %s184 = sand.u32 %s109, 1
        %s185 = scalar_lea.sflag [#allocation3], %s184
        %s186 = sand.u32 %s109, 1
        %s187 = smul.addr %s186, 64
        %s188 = scalar_lea.vmem [#allocation2], %s187
        %s189 = smul.u32 2, %s22
        %p190 = scmp.lt.s32.totalorder %s21, 1
        %s191 = scalar_select %p190, %s21, 1
        %p192 = scmp.lt.s32.totalorder %s189, 1
        %s193 = scalar_select %p192, %s189, 1
        %s194 = smul.addr %s191, 2
        %s195 = sadd.s32 %s193, %s194
        %s196 = smul.addr %s195, 4
        %s197 = scalar_lea.vmem %s0, %s196
        %s198 = smul.u32 2, %s22
        %s199 = smul.u32 2, %s22
        %v200 = vld [vmem:[%s197] sm:$0x77]
        %v201 = vld [vmem:[%s1] sm:$0xff]
        %v202 = vld [vmem:[%s1 + $0x8] sm:$0xff]
        %v203 = vld [vmem:[%s1 + $0x10] sm:$0xff]
        %v204 = vld [vmem:[%s1 + $0x18] sm:$0xff]
        %v205 = vld [vmem:[%s2] sm:$0xff]
        %v206 = vld [vmem:[%s2 + $0x8] sm:$0xff]
        %v207 = vld [vmem:[%s2 + $0x10] sm:$0xff]
        %v208 = vld [vmem:[%s2 + $0x18] sm:$0xff]
        %210 = vset.pattern.permute.xlu0 0
        %211 = vperm.xlu0 %210, %v201
        %v212 = vpop.permute.xlu0 %211
        %215 = vset.pattern.permute.xlu0 0
        %216 = vperm.xlu0 %215, %v202
        %v217 = vpop.permute.xlu0 %216
        %220 = vset.pattern.permute.xlu0 0
        %221 = vperm.xlu0 %220, %v203
        %v222 = vpop.permute.xlu0 %221
        %225 = vset.pattern.permute.xlu0 0
        %226 = vperm.xlu0 %225, %v204
        %v227 = vpop.permute.xlu0 %226
        %v230 = vlaneseq
        %v231 = vshrl.u32 %v230, 7
        %v232 = vsub.s32 0, %v231
        %v233 = vrot.slane %v200, %v232
        %v234 = vlaneseq
        %v235 = vshrl.u32 %v234, 7
        %v236 = vsub.s32 4, %v235
        %v237 = vrot.slane %v200, %v236
        %v240 = vlaneseq
        %v241 = vshrl.u32 %v240, 7
        %v242 = vsub.s32 0, %v241
        %v243 = vrot.slane %v233, %v242
        %v244 = vlaneseq
        %v245 = vshrl.u32 %v244, 7
        %v246 = vsub.s32 0, %v245
        %v247 = vrot.slane %v237, %v246
        %v248 = vmul.f32 %v212, %v243
        %v249 = vmul.f32 %v212, %v247
        %v250 = vmul.f32 %v217, %v243
        %v251 = vmul.f32 %v217, %v247
        %v252 = vmul.f32 %v222, %v243
        %v253 = vmul.f32 %v222, %v247
        %v254 = vmul.f32 %v227, %v243
        %v255 = vmul.f32 %v227, %v247
        %256 = vset.pattern.permute.xlu0 1
        %257 = vperm.xlu0 %256, %v201
        %v258 = vpop.permute.xlu0 %257
        %260 = vset.pattern.permute.xlu0 1
        %261 = vperm.xlu0 %260, %v202
        %v262 = vpop.permute.xlu0 %261
        %264 = vset.pattern.permute.xlu0 1
        %265 = vperm.xlu0 %264, %v203
        %v266 = vpop.permute.xlu0 %265
        %268 = vset.pattern.permute.xlu0 1
        %269 = vperm.xlu0 %268, %v204
        %v270 = vpop.permute.xlu0 %269
        %v272 = vlaneseq
        %v273 = vshrl.u32 %v272, 7
        %v274 = vsub.s32 1, %v273
        %v275 = vrot.slane %v200, %v274
        %v276 = vlaneseq
        %v277 = vshrl.u32 %v276, 7
        %v278 = vsub.s32 5, %v277
        %v279 = vrot.slane %v200, %v278
        %v282 = vlaneseq
        %v283 = vshrl.u32 %v282, 7
        %v284 = vsub.s32 1, %v283
        %v285 = vrot.slane %v275, %v284
        %v286 = vlaneseq
        %v287 = vshrl.u32 %v286, 7
        %v288 = vsub.s32 1, %v287
        %v289 = vrot.slane %v279, %v288
        %v290 = vmul.f32 %v258, %v285
        %v291 = vmul.f32 %v258, %v289
        %v292 = vmul.f32 %v262, %v285
        %v293 = vmul.f32 %v262, %v289
        %v294 = vmul.f32 %v266, %v285
        %v295 = vmul.f32 %v266, %v289
        %v296 = vmul.f32 %v270, %v285
        %v297 = vmul.f32 %v270, %v289
        %v298 = vadd.f32 %v248, %v290
        %v299 = vadd.f32 %v249, %v291
        %v300 = vadd.f32 %v250, %v292
        %v301 = vadd.f32 %v251, %v293
        %v302 = vadd.f32 %v252, %v294
        %v303 = vadd.f32 %v253, %v295
        %v304 = vadd.f32 %v254, %v296
        %v305 = vadd.f32 %v255, %v297
        %306 = vset.pattern.permute.xlu0 2
        %307 = vperm.xlu0 %306, %v201
        %v308 = vpop.permute.xlu0 %307
        %310 = vset.pattern.permute.xlu0 2
        %311 = vperm.xlu0 %310, %v202
        %v312 = vpop.permute.xlu0 %311
        %314 = vset.pattern.permute.xlu0 2
        %315 = vperm.xlu0 %314, %v203
        %v316 = vpop.permute.xlu0 %315
        %318 = vset.pattern.permute.xlu0 2
        %319 = vperm.xlu0 %318, %v204
        %v320 = vpop.permute.xlu0 %319
        %v322 = vlaneseq
        %v323 = vshrl.u32 %v322, 7
        %v324 = vsub.s32 2, %v323
        %v325 = vrot.slane %v200, %v324
        %v326 = vlaneseq
        %v327 = vshrl.u32 %v326, 7
        %v328 = vsub.s32 6, %v327
        %v329 = vrot.slane %v200, %v328
        %v332 = vlaneseq
        %v333 = vshrl.u32 %v332, 7
        %v334 = vsub.s32 2, %v333
        %v335 = vrot.slane %v325, %v334
        %v336 = vlaneseq
        %v337 = vshrl.u32 %v336, 7
        %v338 = vsub.s32 2, %v337
        %v339 = vrot.slane %v329, %v338
        %v340 = vmul.f32 %v308, %v335
        %v341 = vmul.f32 %v308, %v339
        %v342 = vmul.f32 %v312, %v335
        %v343 = vmul.f32 %v312, %v339
        %v344 = vmul.f32 %v316, %v335
        %v345 = vmul.f32 %v316, %v339
        %v346 = vmul.f32 %v320, %v335
        %v347 = vmul.f32 %v320, %v339
        %v348 = vadd.f32 %v298, %v340
        %v349 = vadd.f32 %v299, %v341
        %v350 = vadd.f32 %v300, %v342
        %v351 = vadd.f32 %v301, %v343
        %v352 = vadd.f32 %v302, %v344
        %v353 = vadd.f32 %v303, %v345
        %v354 = vadd.f32 %v304, %v346
        %v355 = vadd.f32 %v305, %v347
        %357 = vset.pattern.permute.xlu0 0
        %358 = vperm.xlu0 %357, %v205
        %v359 = vpop.permute.xlu0 %358
        %362 = vset.pattern.permute.xlu0 0
        %363 = vperm.xlu0 %362, %v206
        %v364 = vpop.permute.xlu0 %363
        %367 = vset.pattern.permute.xlu0 0
        %368 = vperm.xlu0 %367, %v207
        %v369 = vpop.permute.xlu0 %368
        %372 = vset.pattern.permute.xlu0 0
        %373 = vperm.xlu0 %372, %v208
        %v374 = vpop.permute.xlu0 %373
        %v376 = vadd.f32 %v348, %v359
        %v377 = vadd.f32 %v349, %v359
        %v378 = vadd.f32 %v350, %v364
        %v379 = vadd.f32 %v351, %v364
        %v380 = vadd.f32 %v352, %v369
        %v381 = vadd.f32 %v353, %v369
        %v382 = vadd.f32 %v354, %v374
        %v383 = vadd.f32 %v355, %v374
        %vm384 = vcmp.gt.f32.partialorder %v376, 0.0
        %vm385 = vcmp.gt.f32.partialorder %v377, 0.0
        %vm386 = vcmp.gt.f32.partialorder %v378, 0.0
        %vm387 = vcmp.gt.f32.partialorder %v379, 0.0
        %vm388 = vcmp.gt.f32.partialorder %v380, 0.0
        %vm389 = vcmp.gt.f32.partialorder %v381, 0.0
        %vm390 = vcmp.gt.f32.partialorder %v382, 0.0
        %vm391 = vcmp.gt.f32.partialorder %v383, 0.0
        %v392 = vmul.f32 %v376, 0.2
        %v393 = vmul.f32 %v377, 0.2
        %v394 = vmul.f32 %v378, 0.2
        %v395 = vmul.f32 %v379, 0.2
        %v396 = vmul.f32 %v380, 0.2
        %v397 = vmul.f32 %v381, 0.2
        %v398 = vmul.f32 %v382, 0.2
        %v399 = vmul.f32 %v383, 0.2
        %v400 = vsel %vm384, %v376, %v392
        %v401 = vsel %vm385, %v377, %v393
        %v402 = vsel %vm386, %v378, %v394
        %v403 = vsel %vm387, %v379, %v395
        %v404 = vsel %vm388, %v380, %v396
        %v405 = vsel %vm389, %v381, %v397
        %v406 = vsel %vm390, %v382, %v398
        %v407 = vsel %vm391, %v383, %v399
        %v408 = vmul.f32 %v400, %v400
        %v409 = vmul.f32 %v401, %v401
        %v410 = vmul.f32 %v402, %v402
        %v411 = vmul.f32 %v403, %v403
        %v412 = vmul.f32 %v404, %v404
        %v413 = vmul.f32 %v405, %v405
        %v414 = vmul.f32 %v406, %v406
        %v415 = vmul.f32 %v407, %v407
        %v416 = vadd.f32 %v408, %v410
        %v417 = vadd.f32 %v416, %v412
        %v418 = vadd.f32 %v417, %v414
        %v419 = vrot.slane %v418, 4
        %v420 = vadd.f32 %v418, %v419
        %v421 = vrot.slane %v420, 2
        %v422 = vadd.f32 %v420, %v421
        %v423 = vrot.slane %v422, 1
        %v424 = vadd.f32 %v422, %v423
        %v425 = vadd.f32 %v409, %v411
        %v426 = vadd.f32 %v425, %v413
        %v427 = vadd.f32 %v426, %v415
        %v428 = vrot.slane %v427, 4
        %v429 = vadd.f32 %v427, %v428
        %v430 = vrot.slane %v429, 2
        %v431 = vadd.f32 %v429, %v430
        %v432 = vrot.slane %v431, 1
        %v433 = vadd.f32 %v431, %v432
        %v434 = vrcp.pop 32.0
        %v435 = vmul.f32 %v424, %v434
        %v436 = vmul.f32 %v433, %v434
        %v437 = vadd.f32 %v435, 1e-08
        %v438 = vadd.f32 %v436, 1e-08
        %v439 = vrsqrt.pop %v437
        %v440 = vrsqrt.pop %v438
        %v441 = vmul.f32 %v400, %v439
        %v442 = vmul.f32 %v401, %v440
        %v443 = vmul.f32 %v402, %v439
        %v444 = vmul.f32 %v403, %v440
        %v445 = vmul.f32 %v404, %v439
        %v446 = vmul.f32 %v405, %v440
        %v447 = vmul.f32 %v406, %v439
        %v448 = vmul.f32 %v407, %v440
        %449 = vst [vmem:[%s188] sm:$0xff] %v441
        %450 = vst [vmem:[%s188 + $0x8] sm:$0xff] %v442
        %451 = vst [vmem:[%s188 + $0x10] sm:$0xff] %v443
        %452 = vst [vmem:[%s188 + $0x18] sm:$0xff] %v444
        %453 = vst [vmem:[%s188 + $0x20] sm:$0xff] %v445
        %454 = vst [vmem:[%s188 + $0x28] sm:$0xff] %v446
        %455 = vst [vmem:[%s188 + $0x30] sm:$0xff] %v447
        %456 = vst [vmem:[%s188 + $0x38] sm:$0xff] %v448
        %s457 = sand.u32 %s109, 1
        %s458 = scalar_lea.sflag [#allocation3], %s457
        %s459 = sand.u32 %s109, 1
        %s460 = smul.addr %s459, 64
        %s461 = scalar_lea.vmem [#allocation2], %s460
        // Predicated region
        $region33: #{tpu_custom_call.1} parent=31 // pred_check
          %p462 = pneg %p119
        $region34: #{tpu_custom_call.1} parent=31 // pred_check_branch
          %464 = sbr.rel (%p462) target = $region36
        $region35: #{tpu_custom_call.1} parent=31 // pred_region
          %s465 = smul.u32 2, %s22
          %s467 = ssub.s32 1024, 1024
          %468 = vsyncadd %s458, %s467
          %s469 = smul.addr %s21, 8
          %s470 = sadd.s32 %s465, %s469
          %s471 = smul.addr %s470, 128
          %s472 = scalar_lea.hbm %s3, %s471
          %s473 = sshll.u32 %s461, 4
          %s474 = int_to_ptr.vmem [resolvable:$true] %s473
          %479 = dma.vmem_to_hbm [thread:$0]  %s474, 1024, %s472, %s458, 256, 256, 16
        $region36: #{tpu_custom_call.1} parent=31 // pred_fallthru
          _
      $region32: #{tpu_custom_call.1} parent=5 // pred_fallthru
        _
      %p480 = scmp.le.s32.totalorder 2, %s12
      // Predicated region
      $region37: #{tpu_custom_call.1} parent=5 // pred_check
        %p481 = pneg %p480
      $region38: #{tpu_custom_call.1} parent=5 // pred_check_branch
        %483 = sbr.rel (%p481) target = $region40
      $region39: #{tpu_custom_call.1} parent=5 // pred_region
        %s484 = ssub.s32 %s12, 2
        // Predicated region
        $region41: #{tpu_custom_call.1} parent=39 // pred_check
          %p485 = pneg %p125
        $region42: #{tpu_custom_call.1} parent=39 // pred_check_branch
          %487 = sbr.rel (%p485) target = $region44
        $region43: #{tpu_custom_call.1} parent=39 // pred_region
          %s488 = sand.u32 %s110, 1
          %s489 = scalar_lea.sflag [#allocation3], %s488
          %s490 = sand.u32 %s110, 1
          %s491 = smul.addr %s490, 64
          %s492 = scalar_lea.vmem [#allocation2], %s491
          %493 = dma.done %s489, 1024
        $region44: #{tpu_custom_call.1} parent=39 // pred_fallthru
          _
      $region40: #{tpu_custom_call.1} parent=5 // pred_fallthru
        _
    $region6: #{tpu_custom_call.1} parent=1 // loop_footer
      %s16 = sadd.s32 1, %s12
    $region7: #{tpu_custom_call.1} parent=1 // loop_footer_branch
      %11 = sbr.rel target = $region3
    $region8: #{tpu_custom_call.1} parent=1 // loop_exit
      _
    %494 = vsyncpa [#allocation3], 1
    %s495 = scalar_lea.sflag [#allocation3], 1
    %496 = vsyncpa %s495, 1

</llo_original>
